<compile_context>
chip_gen: v5e
topology: v5e:2x2
jax: 0.10.0
libtpu: 0.0.40
codegen_flags: <defaults>
</compile_context>

<pallas_src>
import jax
import jax.numpy as jnp
from jax.experimental import pallas as pl
from jax.experimental.pallas import tpu as pltpu


def _cdiv(a, b):
    return -(-a // b)


def _round_up(x, m):
    return _cdiv(x, m) * m


def _pick_tile(dim, cap, align):
    """Tile <= cap (align-rounded) that pads `dim` by at most ~one align unit."""
    cap = max(align, (cap // align) * align)
    if dim <= cap:
        return _round_up(dim, align)
    n_tiles = _cdiv(dim, cap)
    return _round_up(_cdiv(dim, n_tiles), align)


# ----------------------------- kernels --------------------------------------

def _linear_kernel(x_ref, w_ref, b_ref, o_ref):
    # grid = (i: batch tiles, j: out-feature tiles); whole K in one tile.
    acc = jnp.dot(x_ref[...], w_ref[...], preferred_element_type=jnp.float32)
    o_ref[...] = (acc + b_ref[...]).astype(o_ref.dtype)


def _linear_kernel_ksplit(x_ref, w_ref, b_ref, o_ref, acc_ref):
    # grid = (i, j, k); k is the reduction axis (last, "arbitrary").
    k = pl.program_id(2)

    @pl.when(k == 0)
    def _():
        acc_ref[...] = jnp.zeros_like(acc_ref)

    acc_ref[...] += jnp.dot(x_ref[...], w_ref[...],
                            preferred_element_type=jnp.float32)

    @pl.when(k == pl.num_programs(2) - 1)
    def _():
        o_ref[...] = (acc_ref[...] + b_ref[...]).astype(o_ref.dtype)


# --------------------------- one-time weight prep ---------------------------

def prepare_weight(weight, compute_dtype=None, pad_to_multiple=128):
    """One-time prep at parameter-load time (NOT per forward).

    PyTorch (out_features, in_features) -> (in_features, out_features),
    optional dtype cast, and zero-pad both dims up to `pad_to_multiple` so the
    per-call hot path almost never has to touch the weight before the kernel.
    NOTE (v7x): prefer bf16 / fp8 compute dtypes; the v7x MXU has no int path.
    """
    w_t = jnp.asarray(weight).T
    if compute_dtype is not None:
        w_t = w_t.astype(compute_dtype)
    if pad_to_multiple:
        K, N = w_t.shape
        Kp = _round_up(K, pad_to_multiple)
        Np = _round_up(N, pad_to_multiple)
        if (Kp, Np) != (K, N):
            w_t = jnp.pad(w_t, ((0, Kp - K), (0, Np - N)))
    return w_t


# ------------------------------- forward ------------------------------------

_VMEM_BUDGET = 40 << 20    # double-buffered tile footprint target (v7x-safe)
_VMEM_HARD_CAP = 56 << 20  # never request more (v7x physical VMEM = 64 MiB/TC)


def multi_label_head(x, w_t, bias, *, tile_b=None, tile_n=None, tile_k=None,
                     compute_dtype=None, out_dtype=None):
    """Equivalent of PyTorch nn.Linear(in_features, out_features)(x).

    x:    (B, in_features)
    w_t:  (>=in_features, >=out_features)  -- from prepare_weight(); any extra
          rows/cols must be zero padding.
    bias: (out_features,)
    returns (B, out_features)
    """
    B, K = x.shape
    N = int(bias.shape[0])
    Kw, Nw = w_t.shape
    assert Kw >= K and Nw >= N, "weight smaller than (in_features, out_features)"

    orig_dtype = x.dtype
    if compute_dtype is not None:
        x = x.astype(compute_dtype)
        w_t = w_t.astype(compute_dtype)  # no-op if prepare_weight already cast
    if out_dtype is None:
        out_dtype = orig_dtype           # match nn.Linear: output dtype = input dtype

    itemsize = jnp.dtype(x.dtype).itemsize
    out_itemsize = jnp.dtype(out_dtype).itemsize
    sub = 8 * max(1, 4 // itemsize)      # sublane multiple: 8 f32 / 16 bf16 / 32 i8

    # ---- tile selection (minimal padding overshoot) -------------------------
    k_single_cap = 4096 if itemsize >= 4 else 8192
    if tile_k is None:
        tile_k = (_round_up(K, 128) if K <= k_single_cap
                  else _pick_tile(K, 2048, 128))
    else:
        tile_k = _round_up(tile_k, 128)
    if tile_n is None:
        tile_n = _pick_tile(N, 512, 128)
    else:
        tile_n = _round_up(tile_n, 128)
    if tile_b is None:
        tile_b = _pick_tile(B, 1024, sub)
    else:
        tile_b = _round_up(tile_b, sub)

    # v7x has 2 TensorCores: expose >= 2 parallel blocks when the batch allows.
    if _cdiv(B, tile_b) * _cdiv(N, tile_n) == 1 and _round_up(B, sub) >= 2 * sub:
        tile_b = _round_up(_cdiv(_round_up(B, sub), 2), sub)

    def footprint(tb, tn, tk):
        per = tb * tk * itemsize + tk * tn * itemsize + tn * 4 + tb * tn * out_itemsize
        acc = tb * tn * 4 if tk < _round_up(K, 128) else 0
        return 2 * per + acc             # 2x: double-buffered pipeline

    # Shrink tiles (prefer keeping the single-K tile) until it fits the budget.
    while footprint(tile_b, tile_n, tile_k) > _VMEM_BUDGET:
        if tile_b > max(sub, 256):
            tile_b = _round_up(tile_b // 2, sub)
        elif tile_n > 256:
            tile_n = _round_up(tile_n // 2, 128)
        elif tile_k > 512:
            tile_k = _round_up(tile_k // 2, 128)
        elif tile_b > sub:
            tile_b = _round_up(tile_b // 2, sub)
        elif tile_n > 128:
            tile_n = _round_up(tile_n // 2, 128)
        elif tile_k > 128:
            tile_k = _round_up(tile_k // 2, 128)
        else:
            break

    Bp = _round_up(B, tile_b)
    Np = _round_up(N, tile_n)
    Kp = _round_up(K, tile_k)
    nb, nn, nk = Bp // tile_b, Np // tile_n, Kp // tile_k
    ksplit = nk > 1

    # ---- pad operands only when needed (weight usually pre-padded) ----------
    if (Bp, Kp) != (B, K):
        x = jnp.pad(x, ((0, Bp - B), (0, Kp - K)))
    if (Kw, Nw) != (Kp, Np):
        if Kw < Kp or Nw < Np:
            w_t = jnp.pad(w_t, ((0, max(0, Kp - Kw)), (0, max(0, Np - Nw))))
        w_t = w_t[:Kp, :Np]
    b2d = bias.astype(jnp.float32).reshape(1, N)
    if Np != N:
        b2d = jnp.pad(b2d, ((0, 0), (0, Np - N)))

    fp = footprint(tile_b, tile_n, tile_k)
    vmem_limit = min(max(int(fp * 1.5) + (4 << 20), 16 << 20), _VMEM_HARD_CAP)

    cost = pl.CostEstimate(
        flops=2 * Bp * Np * Kp,
        bytes_accessed=(Bp * Kp * itemsize * nn      # x re-read per N tile
                        + Kp * Np * itemsize * nb    # w re-read per B tile
                        + Np * 4
                        + Bp * Np * out_itemsize),
        transcendentals=0,
    )

    if ksplit:
        grid = (nb, nn, nk)
        in_specs = [
            pl.BlockSpec((tile_b, tile_k), lambda i, j, k: (i, k)),
            pl.BlockSpec((tile_k, tile_n), lambda i, j, k: (k, j)),
            pl.BlockSpec((1, tile_n),      lambda i, j, k: (0, j)),
        ]
        out_specs = pl.BlockSpec((tile_b, tile_n), lambda i, j, k: (i, j))
        scratch = [pltpu.VMEM((tile_b, tile_n), jnp.float32)]
        kernel = _linear_kernel_ksplit
        semantics = ("parallel", "parallel", "arbitrary")
    else:
        grid = (nb, nn)
        in_specs = [
            pl.BlockSpec((tile_b, Kp), lambda i, j: (i, 0)),
            pl.BlockSpec((Kp, tile_n), lambda i, j: (0, j)),
            pl.BlockSpec((1, tile_n),  lambda i, j: (0, j)),
        ]
        out_specs = pl.BlockSpec((tile_b, tile_n), lambda i, j: (i, j))
        scratch = []
        kernel = _linear_kernel
        semantics = ("parallel", "parallel")

    out = pl.pallas_call(
        kernel,
        out_shape=jax.ShapeDtypeStruct((Bp, Np), out_dtype),
        grid_spec=pltpu.PrefetchScalarGridSpec(
            num_scalar_prefetch=0,
            grid=grid,
            in_specs=in_specs,
            out_specs=out_specs,
            scratch_shapes=scratch,
        ),
        compiler_params=pltpu.CompilerParams(
            dimension_semantics=semantics,
            vmem_limit_bytes=vmem_limit,
        ),
        cost_estimate=cost,
    )(x, w_t, b2d)

    if (Bp, Np) != (B, N):
        out = out[:B, :N]
    return out


if __name__ == "__main__":
    # Small shapes consistent with MultiLabelHead(in_features, out_features).
    batch, in_features, out_features = 8, 32, 16

    key = jax.random.PRNGKey(0)
    kx, kw, kb = jax.random.split(key, 3)

    x = jax.random.normal(kx, (batch, in_features), dtype=jnp.float32)
    # Deterministic parameter init (PyTorch Linear-style uniform bound).
    bound = 1.0 / (in_features ** 0.5)
    weight = jax.random.uniform(kw, (out_features, in_features),
                                minval=-bound, maxval=bound, dtype=jnp.float32)
    bias = jax.random.uniform(kb, (out_features,),
                              minval=-bound, maxval=bound, dtype=jnp.float32)

    # One-time weight prep (transpose + pad off the per-call hot path).
    w_t = prepare_weight(weight)

    fwd = jax.jit(multi_label_head)
    out = fwd(x, w_t, bias)
    out = jax.block_until_ready(out)

    # Correctness check against plain JAX reference.
    ref = x @ weight.T + bias
    assert out.shape == (batch, out_features)
    assert jnp.allclose(out, ref, atol=1e-5, rtol=1e-5), "mismatch vs reference"

    print("KERNEL_OK")
</pallas_src>

<mosaic_0001>
module attributes {stable_mosaic.version = 11 : i64} {
  func.func @_linear_kernel(%arg0: i32, %arg1: i32, %arg2: memref<8x128xf32, #tpu.memory_space<vmem>>, %arg3: memref<128x128xf32, #tpu.memory_space<vmem>>, %arg4: memref<1x128xf32, #tpu.memory_space<vmem>>, %arg5: memref<8x128xf32, #tpu.memory_space<vmem>>) attributes {dimension_semantics = [#tpu.dimension_semantics<parallel>, #tpu.dimension_semantics<parallel>], iteration_bounds = array<i64: 1, 1>, scalar_prefetch = 0 : i64, scratch_operands = 0 : i64, tpu.core_type = #tpu.core_type<tc>, window_params = [{transform_indices = @transform_0, window_bounds = array<i64: 8, 128>}, {transform_indices = @transform_1, window_bounds = array<i64: 128, 128>}, {transform_indices = @transform_2, window_bounds = array<i64: 1, 128>}, {transform_indices = @transform_3, window_bounds = array<i64: 8, 128>}]} {
    %c0 = arith.constant 0 : index
    %c0_0 = arith.constant 0 : index
    %0 = vector.load %arg2[%c0, %c0_0] : memref<8x128xf32, #tpu.memory_space<vmem>>, vector<8x128xf32>
    %c0_1 = arith.constant 0 : index
    %c0_2 = arith.constant 0 : index
    %1 = vector.load %arg3[%c0_1, %c0_2] : memref<128x128xf32, #tpu.memory_space<vmem>>, vector<128x128xf32>
    %cst = arith.constant dense<0.000000e+00> : vector<8x128xf32>
    %2 = tpu.matmul %0, %1, %cst {dimension_numbers = #tpu.dot_dimension_numbers<[1], [0], [0], [1], [0, 0, 1, 1], [], []>} : vector<8x128xf32>, vector<128x128xf32>, vector<8x128xf32> -> vector<8x128xf32>
    %c0_3 = arith.constant 0 : index
    %c0_4 = arith.constant 0 : index
    %3 = vector.load %arg4[%c0_3, %c0_4] : memref<1x128xf32, #tpu.memory_space<vmem>>, vector<1x128xf32>
    %4 = vector.broadcast %3 : vector<1x128xf32> to vector<8x128xf32>
    %5 = arith.addf %2, %4 : vector<8x128xf32>
    %c0_5 = arith.constant 0 : index
    %c0_6 = arith.constant 0 : index
    %6 = vector.load %arg5[%c0_5, %c0_6] : memref<8x128xf32, #tpu.memory_space<vmem>>, vector<8x128xf32>
    tpu.vector_store %arg5[%c0_5, %c0_6], %5 {strides = array<i32>} : memref<8x128xf32, #tpu.memory_space<vmem>>, vector<8x128xf32>,
    return
  }
  func.func @transform_0(%arg0: i32, %arg1: i32) -> (i32, i32) {
    %c0_i32 = arith.constant 0 : i32
    %c0_i32_0 = arith.constant 0 : i32
    return %arg0, %c0_i32 : i32, i32
  }
  func.func @transform_1(%arg0: i32, %arg1: i32) -> (i32, i32) {
    %c0_i32 = arith.constant 0 : i32
    %c0_i32_0 = arith.constant 0 : i32
    return %c0_i32, %arg1 : i32, i32
  }
  func.func @transform_2(%arg0: i32, %arg1: i32) -> (i32, i32) {
    %c0_i32 = arith.constant 0 : i32
    %c0_i32_0 = arith.constant 0 : i32
    return %c0_i32, %arg1 : i32, i32
  }
  func.func @transform_3(%arg0: i32, %arg1: i32) -> (i32, i32) {
    %c0_i32 = arith.constant 0 : i32
    return %arg0, %arg1 : i32, i32
  }
}

</mosaic_0001>

<llo_original>
// kernel: multi_label_head.1
$region0: #{multi_label_head.1}
  #allocation0 [shape = 'u32[]', space=smem, size = 0x4, offset = 0x4, fixed_abs, tag = 'smem constant byte address 0x4 - core index']
  #allocation1 [shape = 'u32[72,128]{1,0:T(1,128)}', space=vmem, size = 0x9000, scoped, tag = 'internal scratch']
  %s0 = inlined_call_operand.vmem [shape: f32[8,128], index: 0, kind: input, shape index: {}]
  %s1 = inlined_call_operand.hbm [shape: f32[128,128], index: 1, kind: input, shape index: {}]
  %s2 = inlined_call_operand.vmem [shape: f32[1,128], index: 2, kind: input, shape index: {}]
  %s3 = inlined_call_operand.hbm [shape: f32[8,128], index: 3, kind: output, shape index: {}]
  %s4 = sld [smem:[#allocation0]]
  $region26: #{multi_label_head.1} parent=0
    _
  %s6 = ssub.s32 1, %s4
  %s7 = scalar_select 0, %s6, %s4
  $region1: #{multi_label_head.1} parent=0
    #allocation2 [shape = 'u8[65536]{0}', space=vmem, size = 0x10000, scoped, tag = 'input window, operand 1, single buffered']
    #allocation3 [shape = 's32[1]{0}', space=sflag, size = 0x4, scoped, tag = 'scoped memory for multi_label_head.1']
    #allocation4 [shape = 's32[1]{0}', space=sflag, size = 0x4, scoped, tag = 'scoped memory for multi_label_head.1']
    #allocation5 [shape = 'u8[4096]{0}', space=vmem, size = 0x1000, scoped, tag = 'output window, operand 0, single buffered']
    %8 = vsyncpa [#allocation3], 0
    %9 = vsyncpa [#allocation4], 0
    // Predicated region
    $region2: #{multi_label_head.1} parent=1 // pred_check
      _
    $region3: #{multi_label_head.1} parent=1 // pred_check_branch
      %11 = sbr.rel (0) target = $region5
    $region4: #{multi_label_head.1} parent=1 // pred_region
      _
    $region5: #{multi_label_head.1} parent=1 // pred_fallthru
      _
    // Predicated region
    $region6: #{multi_label_head.1} parent=1 // pred_check
      _
    $region7: #{multi_label_head.1} parent=1 // pred_check_branch
      %13 = sbr.rel (0) target = $region9
    $region8: #{multi_label_head.1} parent=1 // pred_region
      %15 = vsyncadd [#allocation3], 0
      %s16 = sshll.u32 %s1, 4
      %s17 = int_to_ptr.hbm [resolvable:$true] %s16
      %s18 = sshll.u32 [#allocation2], 4
      %s19 = int_to_ptr.vmem [resolvable:$true] %s18
      %24 = dma.hbm_to_vmem [thread:$0]  %s17, 2048, %s19, [#allocation3], 128, 128, 8
    $region9: #{multi_label_head.1} parent=1 // pred_fallthru
      _
    // Predicated region
    $region10: #{multi_label_head.1} parent=1 // pred_check
      _
    $region11: #{multi_label_head.1} parent=1 // pred_check_branch
      %26 = sbr.rel (0) target = $region13
    $region12: #{multi_label_head.1} parent=1 // pred_region
      _
    $region13: #{multi_label_head.1} parent=1 // pred_fallthru
      _
    // Predicated region
    $region14: #{multi_label_head.1} parent=1 // pred_check
      _
    $region15: #{multi_label_head.1} parent=1 // pred_check_branch
      %28 = sbr.rel (0) target = $region17
    $region16: #{multi_label_head.1} parent=1 // pred_region
      %30 = dma.done [#allocation3], 2048
    $region17: #{multi_label_head.1} parent=1 // pred_fallthru
      _
    %v31 = vld [vmem:[%s0] sm:$0xff]
    %v32 = vld [vmem:[#allocation2] sm:$0xff]
    %v33 = vld [vmem:[#allocation2 + $0x8] sm:$0xff]
    %v34 = vld [vmem:[#allocation2 + $0x10] sm:$0xff]
    %v35 = vld [vmem:[#allocation2 + $0x18] sm:$0xff]
    %v36 = vld [vmem:[#allocation2 + $0x20] sm:$0xff]
    %v37 = vld [vmem:[#allocation2 + $0x28] sm:$0xff]
    %v38 = vld [vmem:[#allocation2 + $0x30] sm:$0xff]
    %v39 = vld [vmem:[#allocation2 + $0x38] sm:$0xff]
    %v40 = vld [vmem:[#allocation2 + $0x40] sm:$0xff]
    %v41 = vld [vmem:[#allocation2 + $0x48] sm:$0xff]
    %v42 = vld [vmem:[#allocation2 + $0x50] sm:$0xff]
    %v43 = vld [vmem:[#allocation2 + $0x58] sm:$0xff]
    %v44 = vld [vmem:[#allocation2 + $0x60] sm:$0xff]
    %v45 = vld [vmem:[#allocation2 + $0x68] sm:$0xff]
    %v46 = vld [vmem:[#allocation2 + $0x70] sm:$0xff]
    %v47 = vld [vmem:[#allocation2 + $0x78] sm:$0xff]
    %v48 = vld [vmem:[%s2] sm:$0x1]
    %v50 = vperm.slane %v48, 0
    %52 = vmatpush.msra.mxu0 %v47
    %53 = vmatpush.msra.mxu0 %v46
    %54 = vmatpush.msra.mxu0 %v45
    %55 = vmatpush.msra.mxu0 %v44
    %56 = vmatpush.msra.mxu0 %v43
    %57 = vmatpush.msra.mxu0 %v42
    %58 = vmatpush.msra.mxu0 %v41
    %59 = vmatpush.msra.mxu0 %v40
    %60 = vmatpush.msra.mxu0 %v39
    %61 = vmatpush.msra.mxu0 %v38
    %62 = vmatpush.msra.mxu0 %v37
    %63 = vmatpush.msra.mxu0 %v36
    %64 = vmatpush.msra.mxu0 %v35
    %65 = vmatpush.msra.mxu0 %v34
    %66 = vmatpush.msra.mxu0 %v33
    %67 = vmatpush.msra.mxu0 %v32
    %68 = vmatmul.f32.gmra.mxu0 %v31
    %v69 = vpop.f32.mrf.mxu0
    %v70 = vadd.f32 %v50, %v69
    %71 = vdwg.mxu0
    %72 = vst [vmem:[#allocation5] sm:$0xff] %v70
    // Predicated region
    $region18: #{multi_label_head.1} parent=1 // pred_check
      _
    $region19: #{multi_label_head.1} parent=1 // pred_check_branch
      %74 = sbr.rel (0) target = $region21
    $region20: #{multi_label_head.1} parent=1 // pred_region
      %76 = vsyncadd [#allocation4], 0
      %s78 = sshll.u32 [#allocation5], 4
      %s79 = int_to_ptr.vmem [resolvable:$true] %s78
      %s80 = sshll.u32 %s3, 4
      %s81 = int_to_ptr.hbm [resolvable:$true] %s80
      %83 = dma.vmem_to_hbm [thread:$0]  %s79, 128, %s81, [#allocation4]
    $region21: #{multi_label_head.1} parent=1 // pred_fallthru
      _
    // Predicated region
    $region22: #{multi_label_head.1} parent=1 // pred_check
      _
    $region23: #{multi_label_head.1} parent=1 // pred_check_branch
      %85 = sbr.rel (0) target = $region25
    $region24: #{multi_label_head.1} parent=1 // pred_region
      %87 = dma.done [#allocation4], 128
    $region25: #{multi_label_head.1} parent=1 // pred_fallthru
      _
    %88 = vsyncpa [#allocation3], 1
    %89 = vsyncpa [#allocation4], 1

</llo_original>
